<compile_context>
chip_gen: v7x
topology: tpu7x:2x2x1
jax: 0.10.0
libtpu: 0.0.40
codegen_flags: <defaults>
</compile_context>

<pallas_src>
import jax
import jax.numpy as jnp
from jax.experimental import pallas as pl
from jax.experimental.pallas import tpu as pltpu

PADDING_VALUE = -100.0
INPUT_SIZE = 1
HIDDEN_SIZE = 2
NUM_GATES = 4 * HIDDEN_SIZE  # i, f, g, o


def _lstm_fc_kernel(x_ref, len_ref, p_ref, out_ref):
    """Whole-sequence LSTM(1->2) recurrence + fused Linear(2->1) + Sigmoid.

    x_ref  : (B, T)   padded inputs, batch-first (feature dim of 1 squeezed)
    len_ref: (B, 1)   int32 sequence lengths
    p_ref  : (6, 4H)  packed parameters:
               row 0      = W_ih^T (input_size == 1)
               rows 1..2  = W_hh^T (one row per hidden unit)
               row 3      = b_ih + b_hh
               row 4[:H]  = fc1 weight
               row 5[0]   = fc1 bias
    out_ref: (B, T)   sigmoid(fc1(lstm_out)) with packed/padded semantics
    """
    B, T = x_ref.shape
    H = HIDDEN_SIZE

    w_ih = p_ref[0:1, :]      # (1, 4H)
    w_hh0 = p_ref[1:2, :]     # (1, 4H)  contribution of h[:, 0]
    w_hh1 = p_ref[2:3, :]     # (1, 4H)  contribution of h[:, 1]
    bias = p_ref[3:4, :]      # (1, 4H)  b_ih + b_hh
    fc_w = p_ref[4:5, 0:H]    # (1, H)
    fc_b = p_ref[5:6, 0:1]    # (1, 1)

    lens = len_ref[...]       # (B, 1) int32
    x_all = x_ref[...]        # (B, T): single VMEM load of the whole sequence

    h = jnp.zeros((B, H), jnp.float32)
    c = jnp.zeros((B, H), jnp.float32)

    # Fully-unrolled static time loop (T is static and tiny; equivalent to
    # lax.fori_loop(..., unroll=True)): straight-line code with full LLO
    # scheduler visibility, no per-step grid or DMA overhead.
    # NOTE: keep the gate math as broadcast VPU multiplies — do NOT switch to
    # jnp.dot/pl.dot; (B,1)x(1,8) / (B,2)x(2,8) are degenerate MXU tiles.
    for t in range(T):
        x_t = x_all[:, t:t + 1]                                # (B, 1)
        gates = x_t * w_ih + bias                              # (B, 4H)
        gates = gates + h[:, 0:1] * w_hh0 + h[:, 1:2] * w_hh1

        # PyTorch gate order: i, f, g, o
        i_g = jax.nn.sigmoid(gates[:, 0 * H:1 * H])
        f_g = jax.nn.sigmoid(gates[:, 1 * H:2 * H])
        g_g = jnp.tanh(gates[:, 2 * H:3 * H])
        o_g = jax.nn.sigmoid(gates[:, 3 * H:4 * H])

        c_new = f_g * c + i_g * g_g
        h_new = o_g * jnp.tanh(c_new)

        # pack_padded_sequence: recurrence only advances while t < length[b]
        valid = t < lens                                       # (B, 1) bool
        h = jnp.where(valid, h_new, h)
        c = jnp.where(valid, c_new, c)

        # pad_packed_sequence: padded timesteps emit padding_value
        lstm_out = jnp.where(valid, h, PADDING_VALUE)          # (B, H)

        # fc1 (2 -> 1), linear part only; sigmoid is batched below.
        y_t = (lstm_out[:, 0:1] * fc_w[:, 0:1]
               + lstm_out[:, 1:2] * fc_w[:, 1:2] + fc_b)       # (B, 1)
        out_ref[:, t:t + 1] = y_t                              # static VMEM store

    # Batched sigmoid over the whole (B, T) slab; single HBM writeback.
    out_ref[...] = jax.nn.sigmoid(out_ref[...])


@jax.jit
def basic_lstm_model_pallas(x_padded, lengths, params):
    """x_padded: (B, T, 1) float32 padded with -100.0; lengths: (B,) int32.

    Returns (B, T, 1) = sigmoid(fc1(pad_packed(LSTM(pack_padded(x))))).
    """
    B, T, _ = x_padded.shape
    x2d = x_padded.reshape(B, T)                       # free reshape, no transpose
    len_col = lengths.astype(jnp.int32).reshape(B, 1)

    G = NUM_GATES
    H = HIDDEN_SIZE
    # Pack all parameters into one tiny (6, 4H) float32 array -> one DMA.
    w_ih_row = params["w_ih"].reshape(1, G)            # W_ih^T  (input_size == 1)
    w_hh_rows = params["w_hh"].T                       # (H, G)  = W_hh^T
    bias_row = (params["b_ih"] + params["b_hh"]).reshape(1, G)
    fc_w_row = jnp.pad(params["fc_w"].reshape(1, H), ((0, 0), (0, G - H)))
    fc_b_row = jnp.pad(params["fc_b"].reshape(1, 1), ((0, 0), (0, G - 1)))
    p = jnp.concatenate([w_ih_row, w_hh_rows, bias_row, fc_w_row, fc_b_row],
                        axis=0).astype(jnp.float32)    # (6, G)

    out2d = pl.pallas_call(
        _lstm_fc_kernel,
        out_shape=jax.ShapeDtypeStruct((B, T), jnp.float32),
        grid=(1,),  # single invocation: whole recurrence in one kernel body
        in_specs=[
            pl.BlockSpec((B, T), lambda i: (0, 0)),    # full sequence, one DMA
            pl.BlockSpec((B, 1), lambda i: (0, 0)),    # lengths
            pl.BlockSpec((6, G), lambda i: (0, 0)),    # packed params, one DMA
        ],
        out_specs=pl.BlockSpec((B, T), lambda i: (0, 0)),
        compiler_params=pltpu.CompilerParams(
            dimension_semantics=("arbitrary",)),
        # If the batch ever grows, add a leading batch-tile grid axis marked
        # "parallel" so v7x's two TensorCores each take a batch slice.
    )(x2d, len_col, p)

    return out2d.reshape(B, T, 1)                      # free reshape back


def _reference_jax(x_padded, lengths, params):
    """Pure-JAX reference (lax.scan) for correctness checking."""
    B, T, _ = x_padded.shape
    w_ih, w_hh = params["w_ih"], params["w_hh"]
    b = params["b_ih"] + params["b_hh"]

    def step(carry, xt_and_t):
        h, c = carry
        x_t, t = xt_and_t
        gates = x_t @ w_ih.T + h @ w_hh.T + b          # (B, 4H)
        i = jax.nn.sigmoid(gates[:, 0:2])
        f = jax.nn.sigmoid(gates[:, 2:4])
        g = jnp.tanh(gates[:, 4:6])
        o = jax.nn.sigmoid(gates[:, 6:8])
        c_new = f * c + i * g
        h_new = o * jnp.tanh(c_new)
        valid = (t < lengths)[:, None]
        h = jnp.where(valid, h_new, h)
        c = jnp.where(valid, c_new, c)
        out = jnp.where(valid, h, PADDING_VALUE)
        return (h, c), out

    h0 = jnp.zeros((B, HIDDEN_SIZE), jnp.float32)
    c0 = jnp.zeros((B, HIDDEN_SIZE), jnp.float32)
    xs = (jnp.transpose(x_padded, (1, 0, 2)), jnp.arange(T))
    _, outs = jax.lax.scan(step, (h0, c0), xs)          # (T, B, H)
    lstm_out = jnp.transpose(outs, (1, 0, 2))           # (B, T, H)
    y = lstm_out @ params["fc_w"].T + params["fc_b"]
    return jax.nn.sigmoid(y)


def _init_params(key):
    """Deterministic init matching PyTorch default shapes (uniform ±1/sqrt(H))."""
    k = 1.0 / jnp.sqrt(jnp.float32(HIDDEN_SIZE))
    keys = jax.random.split(key, 6)
    u = lambda kk, shape: jax.random.uniform(kk, shape, jnp.float32, -k, k)
    return {
        "w_ih": u(keys[0], (NUM_GATES, INPUT_SIZE)),
        "w_hh": u(keys[1], (NUM_GATES, HIDDEN_SIZE)),
        "b_ih": u(keys[2], (NUM_GATES,)),
        "b_hh": u(keys[3], (NUM_GATES,)),
        "fc_w": u(keys[4], (1, HIDDEN_SIZE)),
        "fc_b": u(keys[5], (1,)),
    }


if __name__ == "__main__":
    key = jax.random.PRNGKey(0)
    pkey, xkey = jax.random.split(key)
    params = _init_params(pkey)

    # Variable-length batch: B=2 sequences of lengths [8, 5], feature dim 1.
    B, T = 2, 8
    lengths = jnp.array([8, 5], dtype=jnp.int32)
    raw = jax.random.normal(xkey, (B, T, 1), dtype=jnp.float32)
    # pad_sequence(..., padding_value=-100.0)
    t_idx = jnp.arange(T)[None, :, None]
    x_padded = jnp.where(t_idx < lengths[:, None, None], raw, PADDING_VALUE)

    out = basic_lstm_model_pallas(x_padded, lengths, params)
    out = jax.block_until_ready(out)

    ref = _reference_jax(x_padded, lengths, params)
    assert out.shape == (B, T, 1)
    assert jnp.allclose(out, ref, atol=1e-5, rtol=1e-5), "mismatch vs reference"

    print("KERNEL_OK")
</pallas_src>

<mosaic_0001>
module attributes {stable_mosaic.version = 11 : i64} {
  func.func @_lstm_fc_kernel(%arg0: i32, %arg1: memref<2x8xf32, #tpu.memory_space<vmem>>, %arg2: memref<2x1xi32, #tpu.memory_space<vmem>>, %arg3: memref<6x8xf32, #tpu.memory_space<vmem>>, %arg4: memref<2x8xf32, #tpu.memory_space<vmem>>) attributes {dimension_semantics = [#tpu.dimension_semantics<arbitrary>], iteration_bounds = array<i64: 1>, scalar_prefetch = 0 : i64, scratch_operands = 0 : i64, tpu.core_type = #tpu.core_type<tc>, window_params = [{pipeline_mode = #tpu.pipeline_mode<synchronous>, transform_indices = @transform_0, window_bounds = array<i64: 2, 8>}, {pipeline_mode = #tpu.pipeline_mode<synchronous>, transform_indices = @transform_1, window_bounds = array<i64: 2, 1>}, {pipeline_mode = #tpu.pipeline_mode<synchronous>, transform_indices = @transform_2, window_bounds = array<i64: 6, 8>}, {pipeline_mode = #tpu.pipeline_mode<synchronous>, transform_indices = @transform_3, window_bounds = array<i64: 2, 8>}]} {
    %c0 = arith.constant 0 : index
    %c0_0 = arith.constant 0 : index
    %0 = vector.load %arg3[%c0, %c0_0] : memref<6x8xf32, #tpu.memory_space<vmem>>, vector<1x8xf32>
    %c1 = arith.constant 1 : index
    %c0_1 = arith.constant 0 : index
    %1 = vector.load %arg3[%c1, %c0_1] : memref<6x8xf32, #tpu.memory_space<vmem>>, vector<1x8xf32>
    %c2 = arith.constant 2 : index
    %c0_2 = arith.constant 0 : index
    %2 = vector.load %arg3[%c2, %c0_2] : memref<6x8xf32, #tpu.memory_space<vmem>>, vector<1x8xf32>
    %c3 = arith.constant 3 : index
    %c0_3 = arith.constant 0 : index
    %3 = vector.load %arg3[%c3, %c0_3] : memref<6x8xf32, #tpu.memory_space<vmem>>, vector<1x8xf32>
    %c4 = arith.constant 4 : index
    %c0_4 = arith.constant 0 : index
    %4 = vector.load %arg3[%c4, %c0_4] : memref<6x8xf32, #tpu.memory_space<vmem>>, vector<1x2xf32>
    %c5 = arith.constant 5 : index
    %c0_5 = arith.constant 0 : index
    %5 = vector.load %arg3[%c5, %c0_5] : memref<6x8xf32, #tpu.memory_space<vmem>>, vector<1x1xf32>
    %c0_6 = arith.constant 0 : index
    %c0_7 = arith.constant 0 : index
    %6 = vector.load %arg2[%c0_6, %c0_7] : memref<2x1xi32, #tpu.memory_space<vmem>>, vector<2x1xi32>
    %c0_8 = arith.constant 0 : index
    %c0_9 = arith.constant 0 : index
    %7 = vector.load %arg1[%c0_8, %c0_9] : memref<2x8xf32, #tpu.memory_space<vmem>>, vector<2x8xf32>
    %cst = arith.constant 0.000000e+00 : f32
    %8 = vector.broadcast %cst : f32 to vector<2x2xf32>
    %cst_10 = arith.constant 0.000000e+00 : f32
    %9 = vector.broadcast %cst_10 : f32 to vector<2x2xf32>
    %10 = vector.extract_strided_slice %7 {offsets = [0, 0], sizes = [2, 1], strides = [1, 1]} : vector<2x8xf32> to vector<2x1xf32>
    %11 = vector.broadcast %10 : vector<2x1xf32> to vector<2x8xf32>
    %12 = vector.broadcast %0 : vector<1x8xf32> to vector<2x8xf32>
    %13 = arith.mulf %11, %12 : vector<2x8xf32>
    %14 = vector.broadcast %3 : vector<1x8xf32> to vector<2x8xf32>
    %15 = arith.addf %13, %14 : vector<2x8xf32>
    %16 = vector.extract_strided_slice %8 {offsets = [0, 0], sizes = [2, 1], strides = [1, 1]} : vector<2x2xf32> to vector<2x1xf32>
    %17 = vector.broadcast %16 : vector<2x1xf32> to vector<2x8xf32>
    %18 = vector.broadcast %1 : vector<1x8xf32> to vector<2x8xf32>
    %19 = arith.mulf %17, %18 : vector<2x8xf32>
    %20 = arith.addf %15, %19 : vector<2x8xf32>
    %21 = vector.extract_strided_slice %8 {offsets = [0, 1], sizes = [2, 1], strides = [1, 1]} : vector<2x2xf32> to vector<2x1xf32>
    %22 = vector.broadcast %21 : vector<2x1xf32> to vector<2x8xf32>
    %23 = vector.broadcast %2 : vector<1x8xf32> to vector<2x8xf32>
    %24 = arith.mulf %22, %23 : vector<2x8xf32>
    %25 = arith.addf %20, %24 : vector<2x8xf32>
    %26 = vector.extract_strided_slice %25 {offsets = [0, 0], sizes = [2, 2], strides = [1, 1]} : vector<2x8xf32> to vector<2x2xf32>
    %27 = arith.negf %26 : vector<2x2xf32>
    %28 = math.exp %27 : vector<2x2xf32>
    %cst_11 = arith.constant 1.000000e+00 : f32
    %29 = vector.broadcast %cst_11 : f32 to vector<2x2xf32>
    %30 = arith.addf %29, %28 : vector<2x2xf32>
    %31 = arith.divf %29, %30 : vector<2x2xf32>
    %32 = vector.extract_strided_slice %25 {offsets = [0, 2], sizes = [2, 2], strides = [1, 1]} : vector<2x8xf32> to vector<2x2xf32>
    %33 = arith.negf %32 : vector<2x2xf32>
    %34 = math.exp %33 : vector<2x2xf32>
    %cst_12 = arith.constant 1.000000e+00 : f32
    %35 = vector.broadcast %cst_12 : f32 to vector<2x2xf32>
    %36 = arith.addf %35, %34 : vector<2x2xf32>
    %37 = arith.divf %35, %36 : vector<2x2xf32>
    %38 = vector.extract_strided_slice %25 {offsets = [0, 4], sizes = [2, 2], strides = [1, 1]} : vector<2x8xf32> to vector<2x2xf32>
    %39 = math.tanh %38 : vector<2x2xf32>
    %40 = vector.extract_strided_slice %25 {offsets = [0, 6], sizes = [2, 2], strides = [1, 1]} : vector<2x8xf32> to vector<2x2xf32>
    %41 = arith.negf %40 : vector<2x2xf32>
    %42 = math.exp %41 : vector<2x2xf32>
    %cst_13 = arith.constant 1.000000e+00 : f32
    %43 = vector.broadcast %cst_13 : f32 to vector<2x2xf32>
    %44 = arith.addf %43, %42 : vector<2x2xf32>
    %45 = arith.divf %43, %44 : vector<2x2xf32>
    %46 = arith.mulf %37, %9 : vector<2x2xf32>
    %47 = arith.mulf %31, %39 : vector<2x2xf32>
    %48 = arith.addf %46, %47 : vector<2x2xf32>
    %49 = math.tanh %48 : vector<2x2xf32>
    %50 = arith.mulf %45, %49 : vector<2x2xf32>
    %c0_i32 = arith.constant 0 : i32
    %51 = vector.broadcast %c0_i32 : i32 to vector<2x1xi32>
    %52 = arith.cmpi sgt, %6, %51 : vector<2x1xi32>
    %53 = vector.shape_cast %52 : vector<2x1xi1> to vector<2x1xi1>
    %54 = vector.broadcast %53 : vector<2x1xi1> to vector<2x2xi1>
    %55 = arith.select %54, %50, %8 : vector<2x2xi1>, vector<2x2xf32>
    %56 = vector.shape_cast %52 : vector<2x1xi1> to vector<2x1xi1>
    %57 = vector.broadcast %56 : vector<2x1xi1> to vector<2x2xi1>
    %58 = arith.select %57, %48, %9 : vector<2x2xi1>, vector<2x2xf32>
    %cst_14 = arith.constant -1.000000e+02 : f32
    %59 = vector.shape_cast %52 : vector<2x1xi1> to vector<2x1xi1>
    %60 = vector.broadcast %59 : vector<2x1xi1> to vector<2x2xi1>
    %61 = vector.broadcast %cst_14 : f32 to vector<2x2xf32>
    %62 = arith.select %60, %55, %61 : vector<2x2xi1>, vector<2x2xf32>
    %63 = vector.extract_strided_slice %62 {offsets = [0, 0], sizes = [2, 1], strides = [1, 1]} : vector<2x2xf32> to vector<2x1xf32>
    %64 = vector.extract_strided_slice %4 {offsets = [0, 0], sizes = [1, 1], strides = [1, 1]} : vector<1x2xf32> to vector<1x1xf32>
    %65 = vector.broadcast %64 : vector<1x1xf32> to vector<2x1xf32>
    %66 = arith.mulf %63, %65 : vector<2x1xf32>
    %67 = vector.extract_strided_slice %62 {offsets = [0, 1], sizes = [2, 1], strides = [1, 1]} : vector<2x2xf32> to vector<2x1xf32>
    %68 = vector.extract_strided_slice %4 {offsets = [0, 1], sizes = [1, 1], strides = [1, 1]} : vector<1x2xf32> to vector<1x1xf32>
    %69 = vector.broadcast %68 : vector<1x1xf32> to vector<2x1xf32>
    %70 = arith.mulf %67, %69 : vector<2x1xf32>
    %71 = arith.addf %66, %70 : vector<2x1xf32>
    %72 = vector.broadcast %5 : vector<1x1xf32> to vector<2x1xf32>
    %73 = arith.addf %71, %72 : vector<2x1xf32>
    %c0_15 = arith.constant 0 : index
    %c0_16 = arith.constant 0 : index
    %74 = vector.load %arg4[%c0_15, %c0_16] : memref<2x8xf32, #tpu.memory_space<vmem>>, vector<2x1xf32>
    tpu.vector_store %arg4[%c0_15, %c0_16], %73 {strides = array<i32>} : memref<2x8xf32, #tpu.memory_space<vmem>>, vector<2x1xf32>,
    %75 = vector.extract_strided_slice %7 {offsets = [0, 1], sizes = [2, 1], strides = [1, 1]} : vector<2x8xf32> to vector<2x1xf32>
    %76 = vector.broadcast %75 : vector<2x1xf32> to vector<2x8xf32>
    %77 = vector.broadcast %0 : vector<1x8xf32> to vector<2x8xf32>
    %78 = arith.mulf %76, %77 : vector<2x8xf32>
    %79 = vector.broadcast %3 : vector<1x8xf32> to vector<2x8xf32>
    %80 = arith.addf %78, %79 : vector<2x8xf32>
    %81 = vector.extract_strided_slice %55 {offsets = [0, 0], sizes = [2, 1], strides = [1, 1]} : vector<2x2xf32> to vector<2x1xf32>
    %82 = vector.broadcast %81 : vector<2x1xf32> to vector<2x8xf32>
    %83 = vector.broadcast %1 : vector<1x8xf32> to vector<2x8xf32>
    %84 = arith.mulf %82, %83 : vector<2x8xf32>
    %85 = arith.addf %80, %84 : vector<2x8xf32>
    %86 = vector.extract_strided_slice %55 {offsets = [0, 1], sizes = [2, 1], strides = [1, 1]} : vector<2x2xf32> to vector<2x1xf32>
    %87 = vector.broadcast %86 : vector<2x1xf32> to vector<2x8xf32>
    %88 = vector.broadcast %2 : vector<1x8xf32> to vector<2x8xf32>
    %89 = arith.mulf %87, %88 : vector<2x8xf32>
    %90 = arith.addf %85, %89 : vector<2x8xf32>
    %91 = vector.extract_strided_slice %90 {offsets = [0, 0], sizes = [2, 2], strides = [1, 1]} : vector<2x8xf32> to vector<2x2xf32>
    %92 = arith.negf %91 : vector<2x2xf32>
    %93 = math.exp %92 : vector<2x2xf32>
    %cst_17 = arith.constant 1.000000e+00 : f32
    %94 = vector.broadcast %cst_17 : f32 to vector<2x2xf32>
    %95 = arith.addf %94, %93 : vector<2x2xf32>
    %96 = arith.divf %94, %95 : vector<2x2xf32>
    %97 = vector.extract_strided_slice %90 {offsets = [0, 2], sizes = [2, 2], strides = [1, 1]} : vector<2x8xf32> to vector<2x2xf32>
    %98 = arith.negf %97 : vector<2x2xf32>
    %99 = math.exp %98 : vector<2x2xf32>
    %cst_18 = arith.constant 1.000000e+00 : f32
    %100 = vector.broadcast %cst_18 : f32 to vector<2x2xf32>
    %101 = arith.addf %100, %99 : vector<2x2xf32>
    %102 = arith.divf %100, %101 : vector<2x2xf32>
    %103 = vector.extract_strided_slice %90 {offsets = [0, 4], sizes = [2, 2], strides = [1, 1]} : vector<2x8xf32> to vector<2x2xf32>
    %104 = math.tanh %103 : vector<2x2xf32>
    %105 = vector.extract_strided_slice %90 {offsets = [0, 6], sizes = [2, 2], strides = [1, 1]} : vector<2x8xf32> to vector<2x2xf32>
    %106 = arith.negf %105 : vector<2x2xf32>
    %107 = math.exp %106 : vector<2x2xf32>
    %cst_19 = arith.constant 1.000000e+00 : f32
    %108 = vector.broadcast %cst_19 : f32 to vector<2x2xf32>
    %109 = arith.addf %108, %107 : vector<2x2xf32>
    %110 = arith.divf %108, %109 : vector<2x2xf32>
    %111 = arith.mulf %102, %58 : vector<2x2xf32>
    %112 = arith.mulf %96, %104 : vector<2x2xf32>
    %113 = arith.addf %111, %112 : vector<2x2xf32>
    %114 = math.tanh %113 : vector<2x2xf32>
    %115 = arith.mulf %110, %114 : vector<2x2xf32>
    %c1_i32 = arith.constant 1 : i32
    %116 = vector.broadcast %c1_i32 : i32 to vector<2x1xi32>
    %117 = arith.cmpi sgt, %6, %116 : vector<2x1xi32>
    %118 = vector.shape_cast %117 : vector<2x1xi1> to vector<2x1xi1>
    %119 = vector.broadcast %118 : vector<2x1xi1> to vector<2x2xi1>
    %120 = arith.select %119, %115, %55 : vector<2x2xi1>, vector<2x2xf32>
    %121 = vector.shape_cast %117 : vector<2x1xi1> to vector<2x1xi1>
    %122 = vector.broadcast %121 : vector<2x1xi1> to vector<2x2xi1>
    %123 = arith.select %122, %113, %58 : vector<2x2xi1>, vector<2x2xf32>
    %cst_20 = arith.constant -1.000000e+02 : f32
    %124 = vector.shape_cast %117 : vector<2x1xi1> to vector<2x1xi1>
    %125 = vector.broadcast %124 : vector<2x1xi1> to vector<2x2xi1>
    %126 = vector.broadcast %cst_20 : f32 to vector<2x2xf32>
    %127 = arith.select %125, %120, %126 : vector<2x2xi1>, vector<2x2xf32>
    %128 = vector.extract_strided_slice %127 {offsets = [0, 0], sizes = [2, 1], strides = [1, 1]} : vector<2x2xf32> to vector<2x1xf32>
    %129 = vector.extract_strided_slice %4 {offsets = [0, 0], sizes = [1, 1], strides = [1, 1]} : vector<1x2xf32> to vector<1x1xf32>
    %130 = vector.broadcast %129 : vector<1x1xf32> to vector<2x1xf32>
    %131 = arith.mulf %128, %130 : vector<2x1xf32>
    %132 = vector.extract_strided_slice %127 {offsets = [0, 1], sizes = [2, 1], strides = [1, 1]} : vector<2x2xf32> to vector<2x1xf32>
    %133 = vector.extract_strided_slice %4 {offsets = [0, 1], sizes = [1, 1], strides = [1, 1]} : vector<1x2xf32> to vector<1x1xf32>
    %134 = vector.broadcast %133 : vector<1x1xf32> to vector<2x1xf32>
    %135 = arith.mulf %132, %134 : vector<2x1xf32>
    %136 = arith.addf %131, %135 : vector<2x1xf32>
    %137 = vector.broadcast %5 : vector<1x1xf32> to vector<2x1xf32>
    %138 = arith.addf %136, %137 : vector<2x1xf32>
    %c0_21 = arith.constant 0 : index
    %c1_22 = arith.constant 1 : index
    %139 = vector.load %arg4[%c0_21, %c1_22] : memref<2x8xf32, #tpu.memory_space<vmem>>, vector<2x1xf32>
    tpu.vector_store %arg4[%c0_21, %c1_22], %138 {strides = array<i32>} : memref<2x8xf32, #tpu.memory_space<vmem>>, vector<2x1xf32>,
    %140 = vector.extract_strided_slice %7 {offsets = [0, 2], sizes = [2, 1], strides = [1, 1]} : vector<2x8xf32> to vector<2x1xf32>
    %141 = vector.broadcast %140 : vector<2x1xf32> to vector<2x8xf32>
    %142 = vector.broadcast %0 : vector<1x8xf32> to vector<2x8xf32>
    %143 = arith.mulf %141, %142 : vector<2x8xf32>
    %144 = vector.broadcast %3 : vector<1x8xf32> to vector<2x8xf32>
    %145 = arith.addf %143, %144 : vector<2x8xf32>
    %146 = vector.extract_strided_slice %120 {offsets = [0, 0], sizes = [2, 1], strides = [1, 1]} : vector<2x2xf32> to vector<2x1xf32>
    %147 = vector.broadcast %146 : vector<2x1xf32> to vector<2x8xf32>
    %148 = vector.broadcast %1 : vector<1x8xf32> to vector<2x8xf32>
    %149 = arith.mulf %147, %148 : vector<2x8xf32>
    %150 = arith.addf %145, %149 : vector<2x8xf32>
    %151 = vector.extract_strided_slice %120 {offsets = [0, 1], sizes = [2, 1], strides = [1, 1]} : vector<2x2xf32> to vector<2x1xf32>
    %152 = vector.broadcast %151 : vector<2x1xf32> to vector<2x8xf32>
    %153 = vector.broadcast %2 : vector<1x8xf32> to vector<2x8xf32>
    %154 = arith.mulf %152, %153 : vector<2x8xf32>
    %155 = arith.addf %150, %154 : vector<2x8xf32>
    %156 = vector.extract_strided_slice %155 {offsets = [0, 0], sizes = [2, 2], strides = [1, 1]} : vector<2x8xf32> to vector<2x2xf32>
    %157 = arith.negf %156 : vector<2x2xf32>
    %158 = math.exp %157 : vector<2x2xf32>
    %cst_23 = arith.constant 1.000000e+00 : f32
    %159 = vector.broadcast %cst_23 : f32 to vector<2x2xf32>
    %160 = arith.addf %159, %158 : vector<2x2xf32>
    %161 = arith.divf %159, %160 : vector<2x2xf32>
    %162 = vector.extract_strided_slice %155 {offsets = [0, 2], sizes = [2, 2], strides = [1, 1]} : vector<2x8xf32> to vector<2x2xf32>
    %163 = arith.negf %162 : vector<2x2xf32>
    %164 = math.exp %163 : vector<2x2xf32>
    %cst_24 = arith.constant 1.000000e+00 : f32
    %165 = vector.broadcast %cst_24 : f32 to vector<2x2xf32>
    %166 = arith.addf %165, %164 : vector<2x2xf32>
    %167 = arith.divf %165, %166 : vector<2x2xf32>
    %168 = vector.extract_strided_slice %155 {offsets = [0, 4], sizes = [2, 2], strides = [1, 1]} : vector<2x8xf32> to vector<2x2xf32>
    %169 = math.tanh %168 : vector<2x2xf32>
    %170 = vector.extract_strided_slice %155 {offsets = [0, 6], sizes = [2, 2], strides = [1, 1]} : vector<2x8xf32> to vector<2x2xf32>
    %171 = arith.negf %170 : vector<2x2xf32>
    %172 = math.exp %171 : vector<2x2xf32>
    %cst_25 = arith.constant 1.000000e+00 : f32
    %173 = vector.broadcast %cst_25 : f32 to vector<2x2xf32>
    %174 = arith.addf %173, %172 : vector<2x2xf32>
    %175 = arith.divf %173, %174 : vector<2x2xf32>
    %176 = arith.mulf %167, %123 : vector<2x2xf32>
    %177 = arith.mulf %161, %169 : vector<2x2xf32>
    %178 = arith.addf %176, %177 : vector<2x2xf32>
    %179 = math.tanh %178 : vector<2x2xf32>
    %180 = arith.mulf %175, %179 : vector<2x2xf32>
    %c2_i32 = arith.constant 2 : i32
    %181 = vector.broadcast %c2_i32 : i32 to vector<2x1xi32>
    %182 = arith.cmpi sgt, %6, %181 : vector<2x1xi32>
    %183 = vector.shape_cast %182 : vector<2x1xi1> to vector<2x1xi1>
    %184 = vector.broadcast %183 : vector<2x1xi1> to vector<2x2xi1>
    %185 = arith.select %184, %180, %120 : vector<2x2xi1>, vector<2x2xf32>
    %186 = vector.shape_cast %182 : vector<2x1xi1> to vector<2x1xi1>
    %187 = vector.broadcast %186 : vector<2x1xi1> to vector<2x2xi1>
    %188 = arith.select %187, %178, %123 : vector<2x2xi1>, vector<2x2xf32>
    %cst_26 = arith.constant -1.000000e+02 : f32
    %189 = vector.shape_cast %182 : vector<2x1xi1> to vector<2x1xi1>
    %190 = vector.broadcast %189 : vector<2x1xi1> to vector<2x2xi1>
    %191 = vector.broadcast %cst_26 : f32 to vector<2x2xf32>
    %192 = arith.select %190, %185, %191 : vector<2x2xi1>, vector<2x2xf32>
    %193 = vector.extract_strided_slice %192 {offsets = [0, 0], sizes = [2, 1], strides = [1, 1]} : vector<2x2xf32> to vector<2x1xf32>
    %194 = vector.extract_strided_slice %4 {offsets = [0, 0], sizes = [1, 1], strides = [1, 1]} : vector<1x2xf32> to vector<1x1xf32>
    %195 = vector.broadcast %194 : vector<1x1xf32> to vector<2x1xf32>
    %196 = arith.mulf %193, %195 : vector<2x1xf32>
    %197 = vector.extract_strided_slice %192 {offsets = [0, 1], sizes = [2, 1], strides = [1, 1]} : vector<2x2xf32> to vector<2x1xf32>
    %198 = vector.extract_strided_slice %4 {offsets = [0, 1], sizes = [1, 1], strides = [1, 1]} : vector<1x2xf32> to vector<1x1xf32>
    %199 = vector.broadcast %198 : vector<1x1xf32> to vector<2x1xf32>
    %200 = arith.mulf %197, %199 : vector<2x1xf32>
    %201 = arith.addf %196, %200 : vector<2x1xf32>
    %202 = vector.broadcast %5 : vector<1x1xf32> to vector<2x1xf32>
    %203 = arith.addf %201, %202 : vector<2x1xf32>
    %c0_27 = arith.constant 0 : index
    %c2_28 = arith.constant 2 : index
    %204 = vector.load %arg4[%c0_27, %c2_28] : memref<2x8xf32, #tpu.memory_space<vmem>>, vector<2x1xf32>
    tpu.vector_store %arg4[%c0_27, %c2_28], %203 {strides = array<i32>} : memref<2x8xf32, #tpu.memory_space<vmem>>, vector<2x1xf32>,
    %205 = vector.extract_strided_slice %7 {offsets = [0, 3], sizes = [2, 1], strides = [1, 1]} : vector<2x8xf32> to vector<2x1xf32>
    %206 = vector.broadcast %205 : vector<2x1xf32> to vector<2x8xf32>
    %207 = vector.broadcast %0 : vector<1x8xf32> to vector<2x8xf32>
    %208 = arith.mulf %206, %207 : vector<2x8xf32>
    %209 = vector.broadcast %3 : vector<1x8xf32> to vector<2x8xf32>
    %210 = arith.addf %208, %209 : vector<2x8xf32>
    %211 = vector.extract_strided_slice %185 {offsets = [0, 0], sizes = [2, 1], strides = [1, 1]} : vector<2x2xf32> to vector<2x1xf32>
    %212 = vector.broadcast %211 : vector<2x1xf32> to vector<2x8xf32>
    %213 = vector.broadcast %1 : vector<1x8xf32> to vector<2x8xf32>
    %214 = arith.mulf %212, %213 : vector<2x8xf32>
    %215 = arith.addf %210, %214 : vector<2x8xf32>
    %216 = vector.extract_strided_slice %185 {offsets = [0, 1], sizes = [2, 1], strides = [1, 1]} : vector<2x2xf32> to vector<2x1xf32>
    %217 = vector.broadcast %216 : vector<2x1xf32> to vector<2x8xf32>
    %218 = vector.broadcast %2 : vector<1x8xf32> to vector<2x8xf32>
    %219 = arith.mulf %217, %218 : vector<2x8xf32>
    %220 = arith.addf %215, %219 : vector<2x8xf32>
    %221 = vector.extract_strided_slice %220 {offsets = [0, 0], sizes = [2, 2], strides = [1, 1]} : vector<2x8xf32> to vector<2x2xf32>
    %222 = arith.negf %221 : vector<2x2xf32>
    %223 = math.exp %222 : vector<2x2xf32>
    %cst_29 = arith.constant 1.000000e+00 : f32
    %224 = vector.broadcast %cst_29 : f32 to vector<2x2xf32>
    %225 = arith.addf %224, %223 : vector<2x2xf32>
    %226 = arith.divf %224, %225 : vector<2x2xf32>
    %227 = vector.extract_strided_slice %220 {offsets = [0, 2], sizes = [2, 2], strides = [1, 1]} : vector<2x8xf32> to vector<2x2xf32>
    %228 = arith.negf %227 : vector<2x2xf32>
    %229 = math.exp %228 : vector<2x2xf32>
    %cst_30 = arith.constant 1.000000e+00 : f32
    %230 = vector.broadcast %cst_30 : f32 to vector<2x2xf32>
    %231 = arith.addf %230, %229 : vector<2x2xf32>
    %232 = arith.divf %230, %231 : vector<2x2xf32>
    %233 = vector.extract_strided_slice %220 {offsets = [0, 4], sizes = [2, 2], strides = [1, 1]} : vector<2x8xf32> to vector<2x2xf32>
    %234 = math.tanh %233 : vector<2x2xf32>
    %235 = vector.extract_strided_slice %220 {offsets = [0, 6], sizes = [2, 2], strides = [1, 1]} : vector<2x8xf32> to vector<2x2xf32>
    %236 = arith.negf %235 : vector<2x2xf32>
    %237 = math.exp %236 : vector<2x2xf32>
    %cst_31 = arith.constant 1.000000e+00 : f32
    %238 = vector.broadcast %cst_31 : f32 to vector<2x2xf32>
    %239 = arith.addf %238, %237 : vector<2x2xf32>
    %240 = arith.divf %238, %239 : vector<2x2xf32>
    %241 = arith.mulf %232, %188 : vector<2x2xf32>
    %242 = arith.mulf %226, %234 : vector<2x2xf32>
    %243 = arith.addf %241, %242 : vector<2x2xf32>
    %244 = math.tanh %243 : vector<2x2xf32>
    %245 = arith.mulf %240, %244 : vector<2x2xf32>
    %c3_i32 = arith.constant 3 : i32
    %246 = vector.broadcast %c3_i32 : i32 to vector<2x1xi32>
    %247 = arith.cmpi sgt, %6, %246 : vector<2x1xi32>
    %248 = vector.shape_cast %247 : vector<2x1xi1> to vector<2x1xi1>
    %249 = vector.broadcast %248 : vector<2x1xi1> to vector<2x2xi1>
    %250 = arith.select %249, %245, %185 : vector<2x2xi1>, vector<2x2xf32>
    %251 = vector.shape_cast %247 : vector<2x1xi1> to vector<2x1xi1>
    %252 = vector.broadcast %251 : vector<2x1xi1> to vector<2x2xi1>
    %253 = arith.select %252, %243, %188 : vector<2x2xi1>, vector<2x2xf32>
    %cst_32 = arith.constant -1.000000e+02 : f32
    %254 = vector.shape_cast %247 : vector<2x1xi1> to vector<2x1xi1>
    %255 = vector.broadcast %254 : vector<2x1xi1> to vector<2x2xi1>
    %256 = vector.broadcast %cst_32 : f32 to vector<2x2xf32>
    %257 = arith.select %255, %250, %256 : vector<2x2xi1>, vector<2x2xf32>
    %258 = vector.extract_strided_slice %257 {offsets = [0, 0], sizes = [2, 1], strides = [1, 1]} : vector<2x2xf32> to vector<2x1xf32>
    %259 = vector.extract_strided_slice %4 {offsets = [0, 0], sizes = [1, 1], strides = [1, 1]} : vector<1x2xf32> to vector<1x1xf32>
    %260 = vector.broadcast %259 : vector<1x1xf32> to vector<2x1xf32>
    %261 = arith.mulf %258, %260 : vector<2x1xf32>
    %262 = vector.extract_strided_slice %257 {offsets = [0, 1], sizes = [2, 1], strides = [1, 1]} : vector<2x2xf32> to vector<2x1xf32>
    %263 = vector.extract_strided_slice %4 {offsets = [0, 1], sizes = [1, 1], strides = [1, 1]} : vector<1x2xf32> to vector<1x1xf32>
    %264 = vector.broadcast %263 : vector<1x1xf32> to vector<2x1xf32>
    %265 = arith.mulf %262, %264 : vector<2x1xf32>
    %266 = arith.addf %261, %265 : vector<2x1xf32>
    %267 = vector.broadcast %5 : vector<1x1xf32> to vector<2x1xf32>
    %268 = arith.addf %266, %267 : vector<2x1xf32>
    %c0_33 = arith.constant 0 : index
    %c3_34 = arith.constant 3 : index
    %269 = vector.load %arg4[%c0_33, %c3_34] : memref<2x8xf32, #tpu.memory_space<vmem>>, vector<2x1xf32>
    tpu.vector_store %arg4[%c0_33, %c3_34], %268 {strides = array<i32>} : memref<2x8xf32, #tpu.memory_space<vmem>>, vector<2x1xf32>,
    %270 = vector.extract_strided_slice %7 {offsets = [0, 4], sizes = [2, 1], strides = [1, 1]} : vector<2x8xf32> to vector<2x1xf32>
    %271 = vector.broadcast %270 : vector<2x1xf32> to vector<2x8xf32>
    %272 = vector.broadcast %0 : vector<1x8xf32> to vector<2x8xf32>
    %273 = arith.mulf %271, %272 : vector<2x8xf32>
    %274 = vector.broadcast %3 : vector<1x8xf32> to vector<2x8xf32>
    %275 = arith.addf %273, %274 : vector<2x8xf32>
    %276 = vector.extract_strided_slice %250 {offsets = [0, 0], sizes = [2, 1], strides = [1, 1]} : vector<2x2xf32> to vector<2x1xf32>
    %277 = vector.broadcast %276 : vector<2x1xf32> to vector<2x8xf32>
    %278 = vector.broadcast %1 : vector<1x8xf32> to vector<2x8xf32>
    %279 = arith.mulf %277, %278 : vector<2x8xf32>
    %280 = arith.addf %275, %279 : vector<2x8xf32>
    %281 = vector.extract_strided_slice %250 {offsets = [0, 1], sizes = [2, 1], strides = [1, 1]} : vector<2x2xf32> to vector<2x1xf32>
    %282 = vector.broadcast %281 : vector<2x1xf32> to vector<2x8xf32>
    %283 = vector.broadcast %2 : vector<1x8xf32> to vector<2x8xf32>
    %284 = arith.mulf %282, %283 : vector<2x8xf32>
    %285 = arith.addf %280, %284 : vector<2x8xf32>
    %286 = vector.extract_strided_slice %285 {offsets = [0, 0], sizes = [2, 2], strides = [1, 1]} : vector<2x8xf32> to vector<2x2xf32>
    %287 = arith.negf %286 : vector<2x2xf32>
    %288 = math.exp %287 : vector<2x2xf32>
    %cst_35 = arith.constant 1.000000e+00 : f32
    %289 = vector.broadcast %cst_35 : f32 to vector<2x2xf32>
    %290 = arith.addf %289, %288 : vector<2x2xf32>
    %291 = arith.divf %289, %290 : vector<2x2xf32>
    %292 = vector.extract_strided_slice %285 {offsets = [0, 2], sizes = [2, 2], strides = [1, 1]} : vector<2x8xf32> to vector<2x2xf32>
    %293 = arith.negf %292 : vector<2x2xf32>
    %294 = math.exp %293 : vector<2x2xf32>
    %cst_36 = arith.constant 1.000000e+00 : f32
    %295 = vector.broadcast %cst_36 : f32 to vector<2x2xf32>
    %296 = arith.addf %295, %294 : vector<2x2xf32>
    %297 = arith.divf %295, %296 : vector<2x2xf32>
    %298 = vector.extract_strided_slice %285 {offsets = [0, 4], sizes = [2, 2], strides = [1, 1]} : vector<2x8xf32> to vector<2x2xf32>
    %299 = math.tanh %298 : vector<2x2xf32>
    %300 = vector.extract_strided_slice %285 {offsets = [0, 6], sizes = [2, 2], strides = [1, 1]} : vector<2x8xf32> to vector<2x2xf32>
    %301 = arith.negf %300 : vector<2x2xf32>
    %302 = math.exp %301 : vector<2x2xf32>
    %cst_37 = arith.constant 1.000000e+00 : f32
    %303 = vector.broadcast %cst_37 : f32 to vector<2x2xf32>
    %304 = arith.addf %303, %302 : vector<2x2xf32>
    %305 = arith.divf %303, %304 : vector<2x2xf32>
    %306 = arith.mulf %297, %253 : vector<2x2xf32>
    %307 = arith.mulf %291, %299 : vector<2x2xf32>
    %308 = arith.addf %306, %307 : vector<2x2xf32>
    %309 = math.tanh %308 : vector<2x2xf32>
    %310 = arith.mulf %305, %309 : vector<2x2xf32>
    %c4_i32 = arith.constant 4 : i32
    %311 = vector.broadcast %c4_i32 : i32 to vector<2x1xi32>
    %312 = arith.cmpi sgt, %6, %311 : vector<2x1xi32>
    %313 = vector.shape_cast %312 : vector<2x1xi1> to vector<2x1xi1>
    %314 = vector.broadcast %313 : vector<2x1xi1> to vector<2x2xi1>
    %315 = arith.select %314, %310, %250 : vector<2x2xi1>, vector<2x2xf32>
    %316 = vector.shape_cast %312 : vector<2x1xi1> to vector<2x1xi1>
    %317 = vector.broadcast %316 : vector<2x1xi1> to vector<2x2xi1>
    %318 = arith.select %317, %308, %253 : vector<2x2xi1>, vector<2x2xf32>
    %cst_38 = arith.constant -1.000000e+02 : f32
    %319 = vector.shape_cast %312 : vector<2x1xi1> to vector<2x1xi1>
    %320 = vector.broadcast %319 : vector<2x1xi1> to vector<2x2xi1>
    %321 = vector.broadcast %cst_38 : f32 to vector<2x2xf32>
    %322 = arith.select %320, %315, %321 : vector<2x2xi1>, vector<2x2xf32>
    %323 = vector.extract_strided_slice %322 {offsets = [0, 0], sizes = [2, 1], strides = [1, 1]} : vector<2x2xf32> to vector<2x1xf32>
    %324 = vector.extract_strided_slice %4 {offsets = [0, 0], sizes = [1, 1], strides = [1, 1]} : vector<1x2xf32> to vector<1x1xf32>
    %325 = vector.broadcast %324 : vector<1x1xf32> to vector<2x1xf32>
    %326 = arith.mulf %323, %325 : vector<2x1xf32>
    %327 = vector.extract_strided_slice %322 {offsets = [0, 1], sizes = [2, 1], strides = [1, 1]} : vector<2x2xf32> to vector<2x1xf32>
    %328 = vector.extract_strided_slice %4 {offsets = [0, 1], sizes = [1, 1], strides = [1, 1]} : vector<1x2xf32> to vector<1x1xf32>
    %329 = vector.broadcast %328 : vector<1x1xf32> to vector<2x1xf32>
    %330 = arith.mulf %327, %329 : vector<2x1xf32>
    %331 = arith.addf %326, %330 : vector<2x1xf32>
    %332 = vector.broadcast %5 : vector<1x1xf32> to vector<2x1xf32>
    %333 = arith.addf %331, %332 : vector<2x1xf32>
    %c0_39 = arith.constant 0 : index
    %c4_40 = arith.constant 4 : index
    %334 = vector.load %arg4[%c0_39, %c4_40] : memref<2x8xf32, #tpu.memory_space<vmem>>, vector<2x1xf32>
    tpu.vector_store %arg4[%c0_39, %c4_40], %333 {strides = array<i32>} : memref<2x8xf32, #tpu.memory_space<vmem>>, vector<2x1xf32>,
    %335 = vector.extract_strided_slice %7 {offsets = [0, 5], sizes = [2, 1], strides = [1, 1]} : vector<2x8xf32> to vector<2x1xf32>
    %336 = vector.broadcast %335 : vector<2x1xf32> to vector<2x8xf32>
    %337 = vector.broadcast %0 : vector<1x8xf32> to vector<2x8xf32>
    %338 = arith.mulf %336, %337 : vector<2x8xf32>
    %339 = vector.broadcast %3 : vector<1x8xf32> to vector<2x8xf32>
    %340 = arith.addf %338, %339 : vector<2x8xf32>
    %341 = vector.extract_strided_slice %315 {offsets = [0, 0], sizes = [2, 1], strides = [1, 1]} : vector<2x2xf32> to vector<2x1xf32>
    %342 = vector.broadcast %341 : vector<2x1xf32> to vector<2x8xf32>
    %343 = vector.broadcast %1 : vector<1x8xf32> to vector<2x8xf32>
    %344 = arith.mulf %342, %343 : vector<2x8xf32>
    %345 = arith.addf %340, %344 : vector<2x8xf32>
    %346 = vector.extract_strided_slice %315 {offsets = [0, 1], sizes = [2, 1], strides = [1, 1]} : vector<2x2xf32> to vector<2x1xf32>
    %347 = vector.broadcast %346 : vector<2x1xf32> to vector<2x8xf32>
    %348 = vector.broadcast %2 : vector<1x8xf32> to vector<2x8xf32>
    %349 = arith.mulf %347, %348 : vector<2x8xf32>
    %350 = arith.addf %345, %349 : vector<2x8xf32>
    %351 = vector.extract_strided_slice %350 {offsets = [0, 0], sizes = [2, 2], strides = [1, 1]} : vector<2x8xf32> to vector<2x2xf32>
    %352 = arith.negf %351 : vector<2x2xf32>
    %353 = math.exp %352 : vector<2x2xf32>
    %cst_41 = arith.constant 1.000000e+00 : f32
    %354 = vector.broadcast %cst_41 : f32 to vector<2x2xf32>
    %355 = arith.addf %354, %353 : vector<2x2xf32>
    %356 = arith.divf %354, %355 : vector<2x2xf32>
    %357 = vector.extract_strided_slice %350 {offsets = [0, 2], sizes = [2, 2], strides = [1, 1]} : vector<2x8xf32> to vector<2x2xf32>
    %358 = arith.negf %357 : vector<2x2xf32>
    %359 = math.exp %358 : vector<2x2xf32>
    %cst_42 = arith.constant 1.000000e+00 : f32
    %360 = vector.broadcast %cst_42 : f32 to vector<2x2xf32>
    %361 = arith.addf %360, %359 : vector<2x2xf32>
    %362 = arith.divf %360, %361 : vector<2x2xf32>
    %363 = vector.extract_strided_slice %350 {offsets = [0, 4], sizes = [2, 2], strides = [1, 1]} : vector<2x8xf32> to vector<2x2xf32>
    %364 = math.tanh %363 : vector<2x2xf32>
    %365 = vector.extract_strided_slice %350 {offsets = [0, 6], sizes = [2, 2], strides = [1, 1]} : vector<2x8xf32> to vector<2x2xf32>
    %366 = arith.negf %365 : vector<2x2xf32>
    %367 = math.exp %366 : vector<2x2xf32>
    %cst_43 = arith.constant 1.000000e+00 : f32
    %368 = vector.broadcast %cst_43 : f32 to vector<2x2xf32>
    %369 = arith.addf %368, %367 : vector<2x2xf32>
    %370 = arith.divf %368, %369 : vector<2x2xf32>
    %371 = arith.mulf %362, %318 : vector<2x2xf32>
    %372 = arith.mulf %356, %364 : vector<2x2xf32>
    %373 = arith.addf %371, %372 : vector<2x2xf32>
    %374 = math.tanh %373 : vector<2x2xf32>
    %375 = arith.mulf %370, %374 : vector<2x2xf32>
    %c5_i32 = arith.constant 5 : i32
    %376 = vector.broadcast %c5_i32 : i32 to vector<2x1xi32>
    %377 = arith.cmpi sgt, %6, %376 : vector<2x1xi32>
    %378 = vector.shape_cast %377 : vector<2x1xi1> to vector<2x1xi1>
    %379 = vector.broadcast %378 : vector<2x1xi1> to vector<2x2xi1>
    %380 = arith.select %379, %375, %315 : vector<2x2xi1>, vector<2x2xf32>
    %381 = vector.shape_cast %377 : vector<2x1xi1> to vector<2x1xi1>
    %382 = vector.broadcast %381 : vector<2x1xi1> to vector<2x2xi1>
    %383 = arith.select %382, %373, %318 : vector<2x2xi1>, vector<2x2xf32>
    %cst_44 = arith.constant -1.000000e+02 : f32
    %384 = vector.shape_cast %377 : vector<2x1xi1> to vector<2x1xi1>
    %385 = vector.broadcast %384 : vector<2x1xi1> to vector<2x2xi1>
    %386 = vector.broadcast %cst_44 : f32 to vector<2x2xf32>
    %387 = arith.select %385, %380, %386 : vector<2x2xi1>, vector<2x2xf32>
    %388 = vector.extract_strided_slice %387 {offsets = [0, 0], sizes = [2, 1], strides = [1, 1]} : vector<2x2xf32> to vector<2x1xf32>
    %389 = vector.extract_strided_slice %4 {offsets = [0, 0], sizes = [1, 1], strides = [1, 1]} : vector<1x2xf32> to vector<1x1xf32>
    %390 = vector.broadcast %389 : vector<1x1xf32> to vector<2x1xf32>
    %391 = arith.mulf %388, %390 : vector<2x1xf32>
    %392 = vector.extract_strided_slice %387 {offsets = [0, 1], sizes = [2, 1], strides = [1, 1]} : vector<2x2xf32> to vector<2x1xf32>
    %393 = vector.extract_strided_slice %4 {offsets = [0, 1], sizes = [1, 1], strides = [1, 1]} : vector<1x2xf32> to vector<1x1xf32>
    %394 = vector.broadcast %393 : vector<1x1xf32> to vector<2x1xf32>
    %395 = arith.mulf %392, %394 : vector<2x1xf32>
    %396 = arith.addf %391, %395 : vector<2x1xf32>
    %397 = vector.broadcast %5 : vector<1x1xf32> to vector<2x1xf32>
    %398 = arith.addf %396, %397 : vector<2x1xf32>
    %c0_45 = arith.constant 0 : index
    %c5_46 = arith.constant 5 : index
    %399 = vector.load %arg4[%c0_45, %c5_46] : memref<2x8xf32, #tpu.memory_space<vmem>>, vector<2x1xf32>
    tpu.vector_store %arg4[%c0_45, %c5_46], %398 {strides = array<i32>} : memref<2x8xf32, #tpu.memory_space<vmem>>, vector<2x1xf32>,
    %400 = vector.extract_strided_slice %7 {offsets = [0, 6], sizes = [2, 1], strides = [1, 1]} : vector<2x8xf32> to vector<2x1xf32>
    %401 = vector.broadcast %400 : vector<2x1xf32> to vector<2x8xf32>
    %402 = vector.broadcast %0 : vector<1x8xf32> to vector<2x8xf32>
    %403 = arith.mulf %401, %402 : vector<2x8xf32>
    %404 = vector.broadcast %3 : vector<1x8xf32> to vector<2x8xf32>
    %405 = arith.addf %403, %404 : vector<2x8xf32>
    %406 = vector.extract_strided_slice %380 {offsets = [0, 0], sizes = [2, 1], strides = [1, 1]} : vector<2x2xf32> to vector<2x1xf32>
    %407 = vector.broadcast %406 : vector<2x1xf32> to vector<2x8xf32>
    %408 = vector.broadcast %1 : vector<1x8xf32> to vector<2x8xf32>
    %409 = arith.mulf %407, %408 : vector<2x8xf32>
    %410 = arith.addf %405, %409 : vector<2x8xf32>
    %411 = vector.extract_strided_slice %380 {offsets = [0, 1], sizes = [2, 1], strides = [1, 1]} : vector<2x2xf32> to vector<2x1xf32>
    %412 = vector.broadcast %411 : vector<2x1xf32> to vector<2x8xf32>
    %413 = vector.broadcast %2 : vector<1x8xf32> to vector<2x8xf32>
    %414 = arith.mulf %412, %413 : vector<2x8xf32>
    %415 = arith.addf %410, %414 : vector<2x8xf32>
    %416 = vector.extract_strided_slice %415 {offsets = [0, 0], sizes = [2, 2], strides = [1, 1]} : vector<2x8xf32> to vector<2x2xf32>
    %417 = arith.negf %416 : vector<2x2xf32>
    %418 = math.exp %417 : vector<2x2xf32>
    %cst_47 = arith.constant 1.000000e+00 : f32
    %419 = vector.broadcast %cst_47 : f32 to vector<2x2xf32>
    %420 = arith.addf %419, %418 : vector<2x2xf32>
    %421 = arith.divf %419, %420 : vector<2x2xf32>
    %422 = vector.extract_strided_slice %415 {offsets = [0, 2], sizes = [2, 2], strides = [1, 1]} : vector<2x8xf32> to vector<2x2xf32>
    %423 = arith.negf %422 : vector<2x2xf32>
    %424 = math.exp %423 : vector<2x2xf32>
    %cst_48 = arith.constant 1.000000e+00 : f32
    %425 = vector.broadcast %cst_48 : f32 to vector<2x2xf32>
    %426 = arith.addf %425, %424 : vector<2x2xf32>
    %427 = arith.divf %425, %426 : vector<2x2xf32>
    %428 = vector.extract_strided_slice %415 {offsets = [0, 4], sizes = [2, 2], strides = [1, 1]} : vector<2x8xf32> to vector<2x2xf32>
    %429 = math.tanh %428 : vector<2x2xf32>
    %430 = vector.extract_strided_slice %415 {offsets = [0, 6], sizes = [2, 2], strides = [1, 1]} : vector<2x8xf32> to vector<2x2xf32>
    %431 = arith.negf %430 : vector<2x2xf32>
    %432 = math.exp %431 : vector<2x2xf32>
    %cst_49 = arith.constant 1.000000e+00 : f32
    %433 = vector.broadcast %cst_49 : f32 to vector<2x2xf32>
    %434 = arith.addf %433, %432 : vector<2x2xf32>
    %435 = arith.divf %433, %434 : vector<2x2xf32>
    %436 = arith.mulf %427, %383 : vector<2x2xf32>
    %437 = arith.mulf %421, %429 : vector<2x2xf32>
    %438 = arith.addf %436, %437 : vector<2x2xf32>
    %439 = math.tanh %438 : vector<2x2xf32>
    %440 = arith.mulf %435, %439 : vector<2x2xf32>
    %c6_i32 = arith.constant 6 : i32
    %441 = vector.broadcast %c6_i32 : i32 to vector<2x1xi32>
    %442 = arith.cmpi sgt, %6, %441 : vector<2x1xi32>
    %443 = vector.shape_cast %442 : vector<2x1xi1> to vector<2x1xi1>
    %444 = vector.broadcast %443 : vector<2x1xi1> to vector<2x2xi1>
    %445 = arith.select %444, %440, %380 : vector<2x2xi1>, vector<2x2xf32>
    %446 = vector.shape_cast %442 : vector<2x1xi1> to vector<2x1xi1>
    %447 = vector.broadcast %446 : vector<2x1xi1> to vector<2x2xi1>
    %448 = arith.select %447, %438, %383 : vector<2x2xi1>, vector<2x2xf32>
    %cst_50 = arith.constant -1.000000e+02 : f32
    %449 = vector.shape_cast %442 : vector<2x1xi1> to vector<2x1xi1>
    %450 = vector.broadcast %449 : vector<2x1xi1> to vector<2x2xi1>
    %451 = vector.broadcast %cst_50 : f32 to vector<2x2xf32>
    %452 = arith.select %450, %445, %451 : vector<2x2xi1>, vector<2x2xf32>
    %453 = vector.extract_strided_slice %452 {offsets = [0, 0], sizes = [2, 1], strides = [1, 1]} : vector<2x2xf32> to vector<2x1xf32>
    %454 = vector.extract_strided_slice %4 {offsets = [0, 0], sizes = [1, 1], strides = [1, 1]} : vector<1x2xf32> to vector<1x1xf32>
    %455 = vector.broadcast %454 : vector<1x1xf32> to vector<2x1xf32>
    %456 = arith.mulf %453, %455 : vector<2x1xf32>
    %457 = vector.extract_strided_slice %452 {offsets = [0, 1], sizes = [2, 1], strides = [1, 1]} : vector<2x2xf32> to vector<2x1xf32>
    %458 = vector.extract_strided_slice %4 {offsets = [0, 1], sizes = [1, 1], strides = [1, 1]} : vector<1x2xf32> to vector<1x1xf32>
    %459 = vector.broadcast %458 : vector<1x1xf32> to vector<2x1xf32>
    %460 = arith.mulf %457, %459 : vector<2x1xf32>
    %461 = arith.addf %456, %460 : vector<2x1xf32>
    %462 = vector.broadcast %5 : vector<1x1xf32> to vector<2x1xf32>
    %463 = arith.addf %461, %462 : vector<2x1xf32>
    %c0_51 = arith.constant 0 : index
    %c6 = arith.constant 6 : index
    %464 = vector.load %arg4[%c0_51, %c6] : memref<2x8xf32, #tpu.memory_space<vmem>>, vector<2x1xf32>
    tpu.vector_store %arg4[%c0_51, %c6], %463 {strides = array<i32>} : memref<2x8xf32, #tpu.memory_space<vmem>>, vector<2x1xf32>,
    %465 = vector.extract_strided_slice %7 {offsets = [0, 7], sizes = [2, 1], strides = [1, 1]} : vector<2x8xf32> to vector<2x1xf32>
    %466 = vector.broadcast %465 : vector<2x1xf32> to vector<2x8xf32>
    %467 = vector.broadcast %0 : vector<1x8xf32> to vector<2x8xf32>
    %468 = arith.mulf %466, %467 : vector<2x8xf32>
    %469 = vector.broadcast %3 : vector<1x8xf32> to vector<2x8xf32>
    %470 = arith.addf %468, %469 : vector<2x8xf32>
    %471 = vector.extract_strided_slice %445 {offsets = [0, 0], sizes = [2, 1], strides = [1, 1]} : vector<2x2xf32> to vector<2x1xf32>
    %472 = vector.broadcast %471 : vector<2x1xf32> to vector<2x8xf32>
    %473 = vector.broadcast %1 : vector<1x8xf32> to vector<2x8xf32>
    %474 = arith.mulf %472, %473 : vector<2x8xf32>
    %475 = arith.addf %470, %474 : vector<2x8xf32>
    %476 = vector.extract_strided_slice %445 {offsets = [0, 1], sizes = [2, 1], strides = [1, 1]} : vector<2x2xf32> to vector<2x1xf32>
    %477 = vector.broadcast %476 : vector<2x1xf32> to vector<2x8xf32>
    %478 = vector.broadcast %2 : vector<1x8xf32> to vector<2x8xf32>
    %479 = arith.mulf %477, %478 : vector<2x8xf32>
    %480 = arith.addf %475, %479 : vector<2x8xf32>
    %481 = vector.extract_strided_slice %480 {offsets = [0, 0], sizes = [2, 2], strides = [1, 1]} : vector<2x8xf32> to vector<2x2xf32>
    %482 = arith.negf %481 : vector<2x2xf32>
    %483 = math.exp %482 : vector<2x2xf32>
    %cst_52 = arith.constant 1.000000e+00 : f32
    %484 = vector.broadcast %cst_52 : f32 to vector<2x2xf32>
    %485 = arith.addf %484, %483 : vector<2x2xf32>
    %486 = arith.divf %484, %485 : vector<2x2xf32>
    %487 = vector.extract_strided_slice %480 {offsets = [0, 2], sizes = [2, 2], strides = [1, 1]} : vector<2x8xf32> to vector<2x2xf32>
    %488 = arith.negf %487 : vector<2x2xf32>
    %489 = math.exp %488 : vector<2x2xf32>
    %cst_53 = arith.constant 1.000000e+00 : f32
    %490 = vector.broadcast %cst_53 : f32 to vector<2x2xf32>
    %491 = arith.addf %490, %489 : vector<2x2xf32>
    %492 = arith.divf %490, %491 : vector<2x2xf32>
    %493 = vector.extract_strided_slice %480 {offsets = [0, 4], sizes = [2, 2], strides = [1, 1]} : vector<2x8xf32> to vector<2x2xf32>
    %494 = math.tanh %493 : vector<2x2xf32>
    %495 = vector.extract_strided_slice %480 {offsets = [0, 6], sizes = [2, 2], strides = [1, 1]} : vector<2x8xf32> to vector<2x2xf32>
    %496 = arith.negf %495 : vector<2x2xf32>
    %497 = math.exp %496 : vector<2x2xf32>
    %cst_54 = arith.constant 1.000000e+00 : f32
    %498 = vector.broadcast %cst_54 : f32 to vector<2x2xf32>
    %499 = arith.addf %498, %497 : vector<2x2xf32>
    %500 = arith.divf %498, %499 : vector<2x2xf32>
    %501 = arith.mulf %492, %448 : vector<2x2xf32>
    %502 = arith.mulf %486, %494 : vector<2x2xf32>
    %503 = arith.addf %501, %502 : vector<2x2xf32>
    %504 = math.tanh %503 : vector<2x2xf32>
    %505 = arith.mulf %500, %504 : vector<2x2xf32>
    %c7_i32 = arith.constant 7 : i32
    %506 = vector.broadcast %c7_i32 : i32 to vector<2x1xi32>
    %507 = arith.cmpi sgt, %6, %506 : vector<2x1xi32>
    %508 = vector.shape_cast %507 : vector<2x1xi1> to vector<2x1xi1>
    %509 = vector.broadcast %508 : vector<2x1xi1> to vector<2x2xi1>
    %510 = arith.select %509, %505, %445 : vector<2x2xi1>, vector<2x2xf32>
    %cst_55 = arith.constant -1.000000e+02 : f32
    %511 = vector.shape_cast %507 : vector<2x1xi1> to vector<2x1xi1>
    %512 = vector.broadcast %511 : vector<2x1xi1> to vector<2x2xi1>
    %513 = vector.broadcast %cst_55 : f32 to vector<2x2xf32>
    %514 = arith.select %512, %510, %513 : vector<2x2xi1>, vector<2x2xf32>
    %515 = vector.extract_strided_slice %514 {offsets = [0, 0], sizes = [2, 1], strides = [1, 1]} : vector<2x2xf32> to vector<2x1xf32>
    %516 = vector.extract_strided_slice %4 {offsets = [0, 0], sizes = [1, 1], strides = [1, 1]} : vector<1x2xf32> to vector<1x1xf32>
    %517 = vector.broadcast %516 : vector<1x1xf32> to vector<2x1xf32>
    %518 = arith.mulf %515, %517 : vector<2x1xf32>
    %519 = vector.extract_strided_slice %514 {offsets = [0, 1], sizes = [2, 1], strides = [1, 1]} : vector<2x2xf32> to vector<2x1xf32>
    %520 = vector.extract_strided_slice %4 {offsets = [0, 1], sizes = [1, 1], strides = [1, 1]} : vector<1x2xf32> to vector<1x1xf32>
    %521 = vector.broadcast %520 : vector<1x1xf32> to vector<2x1xf32>
    %522 = arith.mulf %519, %521 : vector<2x1xf32>
    %523 = arith.addf %518, %522 : vector<2x1xf32>
    %524 = vector.broadcast %5 : vector<1x1xf32> to vector<2x1xf32>
    %525 = arith.addf %523, %524 : vector<2x1xf32>
    %c0_56 = arith.constant 0 : index
    %c7 = arith.constant 7 : index
    %526 = vector.load %arg4[%c0_56, %c7] : memref<2x8xf32, #tpu.memory_space<vmem>>, vector<2x1xf32>
    tpu.vector_store %arg4[%c0_56, %c7], %525 {strides = array<i32>} : memref<2x8xf32, #tpu.memory_space<vmem>>, vector<2x1xf32>,
    %c0_57 = arith.constant 0 : index
    %c0_58 = arith.constant 0 : index
    %527 = vector.load %arg4[%c0_57, %c0_58] : memref<2x8xf32, #tpu.memory_space<vmem>>, vector<2x8xf32>
    %528 = arith.negf %527 : vector<2x8xf32>
    %529 = math.exp %528 : vector<2x8xf32>
    %cst_59 = arith.constant 1.000000e+00 : f32
    %530 = vector.broadcast %cst_59 : f32 to vector<2x8xf32>
    %531 = arith.addf %530, %529 : vector<2x8xf32>
    %532 = arith.divf %530, %531 : vector<2x8xf32>
    %c0_60 = arith.constant 0 : index
    %c0_61 = arith.constant 0 : index
    %533 = vector.load %arg4[%c0_60, %c0_61] : memref<2x8xf32, #tpu.memory_space<vmem>>, vector<2x8xf32>
    tpu.vector_store %arg4[%c0_60, %c0_61], %532 {strides = array<i32>} : memref<2x8xf32, #tpu.memory_space<vmem>>, vector<2x8xf32>,
    return
  }
  func.func @transform_0(%arg0: i32) -> (i32, i32) {
    %c0_i32 = arith.constant 0 : i32
    %c0_i32_0 = arith.constant 0 : i32
    %c0_i32_1 = arith.constant 0 : i32
    return %c0_i32, %c0_i32_0 : i32, i32
  }
  func.func @transform_1(%arg0: i32) -> (i32, i32) {
    %c0_i32 = arith.constant 0 : i32
    %c0_i32_0 = arith.constant 0 : i32
    %c0_i32_1 = arith.constant 0 : i32
    return %c0_i32, %c0_i32_0 : i32, i32
  }
  func.func @transform_2(%arg0: i32) -> (i32, i32) {
    %c0_i32 = arith.constant 0 : i32
    %c0_i32_0 = arith.constant 0 : i32
    %c0_i32_1 = arith.constant 0 : i32
    return %c0_i32, %c0_i32_0 : i32, i32
  }
  func.func @transform_3(%arg0: i32) -> (i32, i32) {
    %c0_i32 = arith.constant 0 : i32
    %c0_i32_0 = arith.constant 0 : i32
    %c0_i32_1 = arith.constant 0 : i32
    return %c0_i32, %c0_i32_0 : i32, i32
  }
}

</mosaic_0001>

<llo_original>
// kernel: basic_lstm_model_pallas.1
$region0: #{basic_lstm_model_pallas.1}
  #allocation0 [shape = 'u32[]', space=smem, size = 0x4, offset = 0x4, fixed_abs, tag = 'smem constant byte address 0x4 - core index']
  #allocation1 [shape = 'u32[144,128]{1,0:T(1,128)}', space=vmem, size = 0x12000, scoped, tag = 'internal scratch']
  %s0 = inlined_call_operand.vmem [shape: f32[2,8], index: 0, kind: input, shape index: {}]
  %s1 = inlined_call_operand.vmem [shape: s32[2,1], index: 1, kind: input, shape index: {}]
  %s2 = inlined_call_operand.vmem [shape: f32[6,8], index: 2, kind: input, shape index: {}]
  %s3 = inlined_call_operand.hbm [shape: f32[2,8], index: 3, kind: output, shape index: {}]
  %s4 = sld [smem:[#allocation0]]
  $region22: #{basic_lstm_model_pallas.1} parent=0
    _
  %s6 = ssub.s32 1, %s4
  %s7 = scalar_select 0, %s6, %s4
  $region1: #{basic_lstm_model_pallas.1} parent=0
    #allocation2 [shape = 'u8[1024]{0}', space=vmem, size = 0x400, scoped, tag = 'output window, operand 0, single buffered']
    #allocation3 [shape = 's32[1]{0}', space=sflag, size = 0x4, scoped, tag = 'scoped memory for basic_lstm_model_pallas.1']
    %8 = vsyncpa [#allocation3], 0
    // Predicated region
    $region2: #{basic_lstm_model_pallas.1} parent=1 // pred_check
      _
    $region3: #{basic_lstm_model_pallas.1} parent=1 // pred_check_branch
      %10 = sbr.rel (0) target = $region5
    $region4: #{basic_lstm_model_pallas.1} parent=1 // pred_region
      _
    $region5: #{basic_lstm_model_pallas.1} parent=1 // pred_fallthru
      _
    // Predicated region
    $region6: #{basic_lstm_model_pallas.1} parent=1 // pred_check
      _
    $region7: #{basic_lstm_model_pallas.1} parent=1 // pred_check_branch
      %12 = sbr.rel (0) target = $region9
    $region8: #{basic_lstm_model_pallas.1} parent=1 // pred_region
      _
    $region9: #{basic_lstm_model_pallas.1} parent=1 // pred_fallthru
      _
    // Predicated region
    $region10: #{basic_lstm_model_pallas.1} parent=1 // pred_check
      _
    $region11: #{basic_lstm_model_pallas.1} parent=1 // pred_check_branch
      %14 = sbr.rel (0) target = $region13
    $region12: #{basic_lstm_model_pallas.1} parent=1 // pred_region
      _
    $region13: #{basic_lstm_model_pallas.1} parent=1 // pred_fallthru
      _
    %v15 = vld [vmem:[%s2] sm:$0x1]
    %v16 = vld [vmem:[%s2 + $0x1] sm:$0x1]
    %v17 = vld [vmem:[%s2 + $0x2] sm:$0x1]
    %v18 = vld [vmem:[%s2 + $0x3] sm:$0x1]
    %v19 = vld [vmem:[%s2 + $0x4] sm:$0x1]
    %v20 = vld [vmem:[%s2 + $0x5] sm:$0x1]
    %v21 = vld [vmem:[%s1] sm:$0x3]
    %v22 = vld [vmem:[%s0] sm:$0x3]
    %24 = vset.pattern.permute.xlu0 0
    %25 = vperm.xlu0 %24, %v22
    %v26 = vpop.permute.xlu0 %25
    %v28 = vlaneseq
    %v29 = vshrl.u32 %v28, 7
    %v30 = vsub.s32 0, %v29
    %v31 = vrot.slane %v15, %v30
    %v32 = vmul.f32 %v26, %v31
    %v33 = vlaneseq
    %v34 = vshrl.u32 %v33, 7
    %v35 = vsub.s32 0, %v34
    %v36 = vrot.slane %v18, %v35
    %v37 = vadd.f32 %v32, %v36
    %v38 = vlaneseq
    %v39 = vshrl.u32 %v38, 7
    %v40 = vsub.s32 0, %v39
    %v41 = vrot.slane %v16, %v40
    %v42 = vmul.f32 %v41, 0.0
    %v43 = vadd.f32 %v37, %v42
    %v44 = vlaneseq
    %v45 = vshrl.u32 %v44, 7
    %v46 = vsub.s32 0, %v45
    %v47 = vrot.slane %v17, %v46
    %v48 = vmul.f32 %v47, 0.0
    %v49 = vadd.f32 %v43, %v48
    %v50 = vxor.u32 %v49, 2147483648
    %v51 = vmul.f32 %v50, 1.442695
    %v52 = vpow.pop %v51
    %v53 = vadd.f32 %v52, 1.0
    %v54 = vrcp.pop %v53
    %v55 = vmul.f32 1.0, %v54
    %v56 = vtanh.pop %v49
    %v57 = vmul.f32 %v55, 0.0
    %59 = vrot.lane.b32.xlu0 %v56, 124
    %v60 = vpop.permute.xlu0 %59
    %v62 = vmul.f32 %v55, %v60
    %64 = vrot.lane.b32.xlu0 %v62, 2
    %v65 = vpop.permute.xlu0 %64
    %v67 = vadd.f32 %v57, %v65
    %v68 = vtanh.pop %v67
    %70 = vrot.lane.b32.xlu0 %v68, 4
    %v71 = vpop.permute.xlu0 %70
    %v73 = vmul.f32 %v55, %v71
    %vm74 = vcmp.gt.s32.totalorder %v21, 0
    %v75 = vsel %vm74, 1, 0
    %76 = vset.pattern.permute.xlu0 0
    %77 = vperm.xlu0 %76, %v75
    %v78 = vpop.permute.xlu0 %77
    %vm79 = vcmp.eq.s32.totalorder %v78, 1
    %v80 = vsel %vm79, %v73, 0.0
    %v81 = vsel %vm79, %v67, 0.0
    %v82 = vsel %vm79, %v73, -100.0
    %v83 = vlaneseq
    %v84 = vshrl.u32 %v83, 7
    %v85 = vsub.s32 0, %v84
    %v86 = vrot.slane %v19, %v85
    %88 = vrot.lane.b32.xlu0 %v86, 6
    %v89 = vpop.permute.xlu0 %88
    %v91 = vmul.f32 %v82, %v89
    %93 = vrot.lane.b32.xlu0 %v91, 127
    %v94 = vpop.permute.xlu0 %93
    %v96 = vadd.f32 %v91, %v94
    %v97 = vlaneseq
    %v98 = vshrl.u32 %v97, 7
    %v99 = vsub.s32 0, %v98
    %v100 = vrot.slane %v20, %v99
    %102 = vrot.lane.b32.xlu0 %v100, 6
    %v103 = vpop.permute.xlu0 %102
    %v105 = vadd.f32 %v96, %v103
    %107 = vrot.lane.b32.xlu0 %v105, 122
    %v108 = vpop.permute.xlu0 %107
    %vm110 = vcmask 1024
    %111 = vst.msk [vmem:[#allocation2] sm:$0x3] %vm110, %v108
    %112 = vset.pattern.permute.xlu0 1
    %113 = vperm.xlu0 %112, %v22
    %v114 = vpop.permute.xlu0 %113
    %v116 = vmul.f32 %v114, %v31
    %v117 = vadd.f32 %v116, %v36
    %119 = vset.pattern.permute.xlu0 6
    %120 = vperm.xlu0 %119, %v80
    %v121 = vpop.permute.xlu0 %120
    %v123 = vmul.f32 %v121, %v41
    %v124 = vadd.f32 %v117, %v123
    %125 = vset.pattern.permute.xlu0 7
    %126 = vperm.xlu0 %125, %v80
    %v127 = vpop.permute.xlu0 %126
    %v129 = vmul.f32 %v127, %v47
    %v130 = vadd.f32 %v124, %v129
    %v131 = vxor.u32 %v130, 2147483648
    %v132 = vmul.f32 %v131, 1.442695
    %v133 = vpow.pop %v132
    %v134 = vadd.f32 %v133, 1.0
    %v135 = vrcp.pop %v134
    %v136 = vmul.f32 1.0, %v135
    %v137 = vtanh.pop %v130
    %v138 = vmul.f32 %v136, %v81
    %140 = vrot.lane.b32.xlu0 %v137, 124
    %v141 = vpop.permute.xlu0 %140
    %v143 = vmul.f32 %v136, %v141
    %145 = vrot.lane.b32.xlu0 %v143, 2
    %v146 = vpop.permute.xlu0 %145
    %v148 = vadd.f32 %v138, %v146
    %v149 = vtanh.pop %v148
    %151 = vrot.lane.b32.xlu0 %v149, 4
    %v152 = vpop.permute.xlu0 %151
    %v154 = vmul.f32 %v136, %v152
    %vm155 = vcmp.gt.s32.totalorder %v21, 1
    %v156 = vsel %vm155, 1, 0
    %157 = vset.pattern.permute.xlu0 0
    %158 = vperm.xlu0 %157, %v156
    %v159 = vpop.permute.xlu0 %158
    %vm160 = vcmp.eq.s32.totalorder %v159, 1
    %v161 = vsel %vm160, %v154, %v80
    %v162 = vsel %vm160, %v148, %v81
    %v163 = vsel %vm160, %v154, -100.0
    %v164 = vmul.f32 %v163, %v89
    %166 = vrot.lane.b32.xlu0 %v164, 127
    %v167 = vpop.permute.xlu0 %166
    %v169 = vadd.f32 %v164, %v167
    %v170 = vadd.f32 %v169, %v103
    %172 = vrot.lane.b32.xlu0 %v170, 123
    %v173 = vpop.permute.xlu0 %172
    %vm175 = vcmask 9224
    %176 = vst.msk [vmem:[#allocation2] sm:$0x3] %vm175, %v173
    %177 = vset.pattern.permute.xlu0 2
    %178 = vperm.xlu0 %177, %v22
    %v179 = vpop.permute.xlu0 %178
    %v181 = vmul.f32 %v179, %v31
    %v182 = vadd.f32 %v181, %v36
    %184 = vset.pattern.permute.xlu0 6
    %185 = vperm.xlu0 %184, %v161
    %v186 = vpop.permute.xlu0 %185
    %v188 = vmul.f32 %v186, %v41
    %v189 = vadd.f32 %v182, %v188
    %190 = vset.pattern.permute.xlu0 7
    %191 = vperm.xlu0 %190, %v161
    %v192 = vpop.permute.xlu0 %191
    %v194 = vmul.f32 %v192, %v47
    %v195 = vadd.f32 %v189, %v194
    %v196 = vxor.u32 %v195, 2147483648
    %v197 = vmul.f32 %v196, 1.442695
    %v198 = vpow.pop %v197
    %v199 = vadd.f32 %v198, 1.0
    %v200 = vrcp.pop %v199
    %v201 = vmul.f32 1.0, %v200
    %v202 = vtanh.pop %v195
    %v203 = vmul.f32 %v201, %v162
    %205 = vrot.lane.b32.xlu0 %v202, 124
    %v206 = vpop.permute.xlu0 %205
    %v208 = vmul.f32 %v201, %v206
    %210 = vrot.lane.b32.xlu0 %v208, 2
    %v211 = vpop.permute.xlu0 %210
    %v213 = vadd.f32 %v203, %v211
    %v214 = vtanh.pop %v213
    %216 = vrot.lane.b32.xlu0 %v214, 4
    %v217 = vpop.permute.xlu0 %216
    %v219 = vmul.f32 %v201, %v217
    %vm220 = vcmp.gt.s32.totalorder %v21, 2
    %v221 = vsel %vm220, 1, 0
    %222 = vset.pattern.permute.xlu0 0
    %223 = vperm.xlu0 %222, %v221
    %v224 = vpop.permute.xlu0 %223
    %vm225 = vcmp.eq.s32.totalorder %v224, 1
    %v226 = vsel %vm225, %v219, %v161
    %v227 = vsel %vm225, %v213, %v162
    %v228 = vsel %vm225, %v219, -100.0
    %v229 = vmul.f32 %v228, %v89
    %231 = vrot.lane.b32.xlu0 %v229, 127
    %v232 = vpop.permute.xlu0 %231
    %v234 = vadd.f32 %v229, %v232
    %v235 = vadd.f32 %v234, %v103
    %237 = vrot.lane.b32.xlu0 %v235, 124
    %v238 = vpop.permute.xlu0 %237
    %vm240 = vcmask 17424
    %241 = vst.msk [vmem:[#allocation2] sm:$0x3] %vm240, %v238
    %242 = vset.pattern.permute.xlu0 3
    %243 = vperm.xlu0 %242, %v22
    %v244 = vpop.permute.xlu0 %243
    %v246 = vmul.f32 %v244, %v31
    %v247 = vadd.f32 %v246, %v36
    %249 = vset.pattern.permute.xlu0 6
    %250 = vperm.xlu0 %249, %v226
    %v251 = vpop.permute.xlu0 %250
    %v253 = vmul.f32 %v251, %v41
    %v254 = vadd.f32 %v247, %v253
    %255 = vset.pattern.permute.xlu0 7
    %256 = vperm.xlu0 %255, %v226
    %v257 = vpop.permute.xlu0 %256
    %v259 = vmul.f32 %v257, %v47
    %v260 = vadd.f32 %v254, %v259
    %v261 = vxor.u32 %v260, 2147483648
    %v262 = vmul.f32 %v261, 1.442695
    %v263 = vpow.pop %v262
    %v264 = vadd.f32 %v263, 1.0
    %v265 = vrcp.pop %v264
    %v266 = vmul.f32 1.0, %v265
    %v267 = vtanh.pop %v260
    %v268 = vmul.f32 %v266, %v227
    %270 = vrot.lane.b32.xlu0 %v267, 124
    %v271 = vpop.permute.xlu0 %270
    %v273 = vmul.f32 %v266, %v271
    %275 = vrot.lane.b32.xlu0 %v273, 2
    %v276 = vpop.permute.xlu0 %275
    %v278 = vadd.f32 %v268, %v276
    %v279 = vtanh.pop %v278
    %281 = vrot.lane.b32.xlu0 %v279, 4
    %v282 = vpop.permute.xlu0 %281
    %v284 = vmul.f32 %v266, %v282
    %vm285 = vcmp.gt.s32.totalorder %v21, 3
    %v286 = vsel %vm285, 1, 0
    %287 = vset.pattern.permute.xlu0 0
    %288 = vperm.xlu0 %287, %v286
    %v289 = vpop.permute.xlu0 %288
    %vm290 = vcmp.eq.s32.totalorder %v289, 1
    %v291 = vsel %vm290, %v284, %v226
    %v292 = vsel %vm290, %v278, %v227
    %v293 = vsel %vm290, %v284, -100.0
    %v294 = vmul.f32 %v293, %v89
    %296 = vrot.lane.b32.xlu0 %v294, 127
    %v297 = vpop.permute.xlu0 %296
    %v299 = vadd.f32 %v294, %v297
    %v300 = vadd.f32 %v299, %v103
    %302 = vrot.lane.b32.xlu0 %v300, 125
    %v303 = vpop.permute.xlu0 %302
    %vm305 = vcmask 25624
    %306 = vst.msk [vmem:[#allocation2] sm:$0x3] %vm305, %v303
    %307 = vset.pattern.permute.xlu0 4
    %308 = vperm.xlu0 %307, %v22
    %v309 = vpop.permute.xlu0 %308
    %v311 = vmul.f32 %v309, %v31
    %v312 = vadd.f32 %v311, %v36
    %314 = vset.pattern.permute.xlu0 6
    %315 = vperm.xlu0 %314, %v291
    %v316 = vpop.permute.xlu0 %315
    %v318 = vmul.f32 %v316, %v41
    %v319 = vadd.f32 %v312, %v318
    %320 = vset.pattern.permute.xlu0 7
    %321 = vperm.xlu0 %320, %v291
    %v322 = vpop.permute.xlu0 %321
    %v324 = vmul.f32 %v322, %v47
    %v325 = vadd.f32 %v319, %v324
    %v326 = vxor.u32 %v325, 2147483648
    %v327 = vmul.f32 %v326, 1.442695
    %v328 = vpow.pop %v327
    %v329 = vadd.f32 %v328, 1.0
    %v330 = vrcp.pop %v329
    %v331 = vmul.f32 1.0, %v330
    %v332 = vtanh.pop %v325
    %v333 = vmul.f32 %v331, %v292
    %335 = vrot.lane.b32.xlu0 %v332, 124
    %v336 = vpop.permute.xlu0 %335
    %v338 = vmul.f32 %v331, %v336
    %340 = vrot.lane.b32.xlu0 %v338, 2
    %v341 = vpop.permute.xlu0 %340
    %v343 = vadd.f32 %v333, %v341
    %v344 = vtanh.pop %v343
    %346 = vrot.lane.b32.xlu0 %v344, 4
    %v347 = vpop.permute.xlu0 %346
    %v349 = vmul.f32 %v331, %v347
    %vm350 = vcmp.gt.s32.totalorder %v21, 4
    %v351 = vsel %vm350, 1, 0
    %352 = vset.pattern.permute.xlu0 0
    %353 = vperm.xlu0 %352, %v351
    %v354 = vpop.permute.xlu0 %353
    %vm355 = vcmp.eq.s32.totalorder %v354, 1
    %v356 = vsel %vm355, %v349, %v291
    %v357 = vsel %vm355, %v343, %v292
    %v358 = vsel %vm355, %v349, -100.0
    %v359 = vmul.f32 %v358, %v89
    %361 = vrot.lane.b32.xlu0 %v359, 127
    %v362 = vpop.permute.xlu0 %361
    %v364 = vadd.f32 %v359, %v362
    %v365 = vadd.f32 %v364, %v103
    %367 = vrot.lane.b32.xlu0 %v365, 126
    %v368 = vpop.permute.xlu0 %367
    %vm370 = vcmask 33824
    %371 = vst.msk [vmem:[#allocation2] sm:$0x3] %vm370, %v368
    %372 = vset.pattern.permute.xlu0 5
    %373 = vperm.xlu0 %372, %v22
    %v374 = vpop.permute.xlu0 %373
    %v376 = vmul.f32 %v374, %v31
    %v377 = vadd.f32 %v376, %v36
    %379 = vset.pattern.permute.xlu0 6
    %380 = vperm.xlu0 %379, %v356
    %v381 = vpop.permute.xlu0 %380
    %v383 = vmul.f32 %v381, %v41
    %v384 = vadd.f32 %v377, %v383
    %385 = vset.pattern.permute.xlu0 7
    %386 = vperm.xlu0 %385, %v356
    %v387 = vpop.permute.xlu0 %386
    %v389 = vmul.f32 %v387, %v47
    %v390 = vadd.f32 %v384, %v389
    %v391 = vxor.u32 %v390, 2147483648
    %v392 = vmul.f32 %v391, 1.442695
    %v393 = vpow.pop %v392
    %v394 = vadd.f32 %v393, 1.0
    %v395 = vrcp.pop %v394
    %v396 = vmul.f32 1.0, %v395
    %v397 = vtanh.pop %v390
    %v398 = vmul.f32 %v396, %v357
    %400 = vrot.lane.b32.xlu0 %v397, 124
    %v401 = vpop.permute.xlu0 %400
    %v403 = vmul.f32 %v396, %v401
    %405 = vrot.lane.b32.xlu0 %v403, 2
    %v406 = vpop.permute.xlu0 %405
    %v408 = vadd.f32 %v398, %v406
    %v409 = vtanh.pop %v408
    %411 = vrot.lane.b32.xlu0 %v409, 4
    %v412 = vpop.permute.xlu0 %411
    %v414 = vmul.f32 %v396, %v412
    %vm415 = vcmp.gt.s32.totalorder %v21, 5
    %v416 = vsel %vm415, 1, 0
    %417 = vset.pattern.permute.xlu0 0
    %418 = vperm.xlu0 %417, %v416
    %v419 = vpop.permute.xlu0 %418
    %vm420 = vcmp.eq.s32.totalorder %v419, 1
    %v421 = vsel %vm420, %v414, %v356
    %v422 = vsel %vm420, %v408, %v357
    %v423 = vsel %vm420, %v414, -100.0
    %v424 = vmul.f32 %v423, %v89
    %426 = vrot.lane.b32.xlu0 %v424, 127
    %v427 = vpop.permute.xlu0 %426
    %v429 = vadd.f32 %v424, %v427
    %v430 = vadd.f32 %v429, %v103
    %432 = vrot.lane.b32.xlu0 %v430, 127
    %v433 = vpop.permute.xlu0 %432
    %vm435 = vcmask 42024
    %436 = vst.msk [vmem:[#allocation2] sm:$0x3] %vm435, %v433
    %437 = vset.pattern.permute.xlu0 6
    %438 = vperm.xlu0 %437, %v22
    %v439 = vpop.permute.xlu0 %438
    %v441 = vmul.f32 %v439, %v31
    %v442 = vadd.f32 %v441, %v36
    %444 = vset.pattern.permute.xlu0 6
    %445 = vperm.xlu0 %444, %v421
    %v446 = vpop.permute.xlu0 %445
    %v448 = vmul.f32 %v446, %v41
    %v449 = vadd.f32 %v442, %v448
    %450 = vset.pattern.permute.xlu0 7
    %451 = vperm.xlu0 %450, %v421
    %v452 = vpop.permute.xlu0 %451
    %v454 = vmul.f32 %v452, %v47
    %v455 = vadd.f32 %v449, %v454
    %v456 = vxor.u32 %v455, 2147483648
    %v457 = vmul.f32 %v456, 1.442695
    %v458 = vpow.pop %v457
    %v459 = vadd.f32 %v458, 1.0
    %v460 = vrcp.pop %v459
    %v461 = vmul.f32 1.0, %v460
    %v462 = vtanh.pop %v455
    %v463 = vmul.f32 %v461, %v422
    %465 = vrot.lane.b32.xlu0 %v462, 124
    %v466 = vpop.permute.xlu0 %465
    %v468 = vmul.f32 %v461, %v466
    %470 = vrot.lane.b32.xlu0 %v468, 2
    %v471 = vpop.permute.xlu0 %470
    %v473 = vadd.f32 %v463, %v471
    %v474 = vtanh.pop %v473
    %476 = vrot.lane.b32.xlu0 %v474, 4
    %v477 = vpop.permute.xlu0 %476
    %v479 = vmul.f32 %v461, %v477
    %vm480 = vcmp.gt.s32.totalorder %v21, 6
    %v481 = vsel %vm480, 1, 0
    %482 = vset.pattern.permute.xlu0 0
    %483 = vperm.xlu0 %482, %v481
    %v484 = vpop.permute.xlu0 %483
    %vm485 = vcmp.eq.s32.totalorder %v484, 1
    %v486 = vsel %vm485, %v479, %v421
    %v487 = vsel %vm485, %v473, %v422
    %v488 = vsel %vm485, %v479, -100.0
    %v489 = vmul.f32 %v488, %v89
    %491 = vrot.lane.b32.xlu0 %v489, 127
    %v492 = vpop.permute.xlu0 %491
    %v494 = vadd.f32 %v489, %v492
    %v495 = vadd.f32 %v494, %v103
    %vm496 = vcmask 50224
    %497 = vst.msk [vmem:[#allocation2] sm:$0x3] %vm496, %v495
    %498 = vset.pattern.permute.xlu0 7
    %499 = vperm.xlu0 %498, %v22
    %v500 = vpop.permute.xlu0 %499
    %v502 = vmul.f32 %v500, %v31
    %v503 = vadd.f32 %v502, %v36
    %505 = vset.pattern.permute.xlu0 6
    %506 = vperm.xlu0 %505, %v486
    %v507 = vpop.permute.xlu0 %506
    %v509 = vmul.f32 %v507, %v41
    %v510 = vadd.f32 %v503, %v509
    %511 = vset.pattern.permute.xlu0 7
    %512 = vperm.xlu0 %511, %v486
    %v513 = vpop.permute.xlu0 %512
    %v515 = vmul.f32 %v513, %v47
    %v516 = vadd.f32 %v510, %v515
    %v517 = vxor.u32 %v516, 2147483648
    %v518 = vmul.f32 %v517, 1.442695
    %v519 = vpow.pop %v518
    %v520 = vadd.f32 %v519, 1.0
    %v521 = vrcp.pop %v520
    %v522 = vmul.f32 1.0, %v521
    %v523 = vtanh.pop %v516
    %v524 = vmul.f32 %v522, %v487
    %526 = vrot.lane.b32.xlu0 %v523, 124
    %v527 = vpop.permute.xlu0 %526
    %v529 = vmul.f32 %v522, %v527
    %531 = vrot.lane.b32.xlu0 %v529, 2
    %v532 = vpop.permute.xlu0 %531
    %v534 = vadd.f32 %v524, %v532
    %v535 = vtanh.pop %v534
    %537 = vrot.lane.b32.xlu0 %v535, 4
    %v538 = vpop.permute.xlu0 %537
    %v540 = vmul.f32 %v522, %v538
    %vm541 = vcmp.gt.s32.totalorder %v21, 7
    %v542 = vsel %vm541, 1, 0
    %543 = vset.pattern.permute.xlu0 0
    %544 = vperm.xlu0 %543, %v542
    %v545 = vpop.permute.xlu0 %544
    %vm546 = vcmp.eq.s32.totalorder %v545, 1
    %v547 = vsel %vm546, %v540, -100.0
    %v548 = vmul.f32 %v547, %v89
    %550 = vrot.lane.b32.xlu0 %v548, 127
    %v551 = vpop.permute.xlu0 %550
    %v553 = vadd.f32 %v548, %v551
    %v554 = vadd.f32 %v553, %v103
    %556 = vrot.lane.b32.xlu0 %v554, 1
    %v557 = vpop.permute.xlu0 %556
    %vm559 = vcmask 58424
    %560 = vst.msk [vmem:[#allocation2] sm:$0x3] %vm559, %v557
    %v561 = vld [vmem:[#allocation2] sm:$0x3]
    %v562 = vxor.u32 %v561, 2147483648
    %v563 = vmul.f32 %v562, 1.442695
    %v564 = vpow.pop %v563
    %v565 = vadd.f32 %v564, 1.0
    %v566 = vrcp.pop %v565
    %v567 = vmul.f32 1.0, %v566
    %vm568 = vcmask 58368
    %569 = vst.msk [vmem:[#allocation2] sm:$0x3] %vm568, %v567
    // Predicated region
    $region14: #{basic_lstm_model_pallas.1} parent=1 // pred_check
      _
    $region15: #{basic_lstm_model_pallas.1} parent=1 // pred_check_branch
      %571 = sbr.rel (0) target = $region17
    $region16: #{basic_lstm_model_pallas.1} parent=1 // pred_region
      %s573 = ssub.s32 32, 32
      %574 = vsyncadd [#allocation3], %s573
      %s576 = sshll.u32 [#allocation2], 4
      %s577 = int_to_ptr.vmem [resolvable:$true] %s576
      %579 = dma.vmem_to_hbm [thread:$0]  %s577, 32, %s3, [#allocation3]
    $region17: #{basic_lstm_model_pallas.1} parent=1 // pred_fallthru
      _
    // Predicated region
    $region18: #{basic_lstm_model_pallas.1} parent=1 // pred_check
      _
    $region19: #{basic_lstm_model_pallas.1} parent=1 // pred_check_branch
      %581 = sbr.rel (0) target = $region21
    $region20: #{basic_lstm_model_pallas.1} parent=1 // pred_region
      %582 = dma.done [#allocation3], 32
    $region21: #{basic_lstm_model_pallas.1} parent=1 // pred_fallthru
      _
    %583 = vsyncpa [#allocation3], 1

</llo_original>
